<compile_context>
chip_gen: v7x
topology: tpu7x:2x2x1
jax: 0.10.0
libtpu: 0.0.40
codegen_flags: <defaults>
</compile_context>

<pallas_src>
import jax
import jax.numpy as jnp
from jax.experimental import pallas as pl
from jax.experimental.pallas import tpu as pltpu


def _make_gather_kernel(rows: int, tile_n: int):
    """Kernel gathering `rows` predicate rows into one (rows, tile_n) block."""
    lane_aligned = (tile_n % 128 == 0)

    def kernel(idx_ref, tv_hbm, out_ref, sem):
        # idx_ref : SMEM i32[K_pad]           scalar-prefetched predicate ids
        # tv_hbm  : HBM  dtype[P, N]          raw ref (memory_space=pl.ANY)
        # out_ref : VMEM dtype[rows, tile_n]  pipelined output block
        # sem     : DMA semaphores, one per row copy
        j = pl.program_id(0)   # column (sample) tile index
        kg = pl.program_id(1)  # row-group index (group of `rows` sub-formulas)
        col0 = j * tile_n
        if lane_aligned:
            col0 = pl.multiple_of(col0, 128)

        copies = []
        for r in range(rows):                    # static unroll
            p = idx_ref[kg * rows + r]           # predicate row for sub-formula
            cp = pltpu.make_async_copy(
                tv_hbm.at[pl.ds(p, 1), pl.ds(col0, tile_n)],
                out_ref.at[pl.ds(r, 1), pl.ds(0, tile_n)],
                sem.at[r],
            )
            cp.start()
            copies.append(cp)
        for cp in copies:
            cp.wait()
        # TODO(synk): Formula.function is abstract (`pass`) in the base class,
        # i.e. identity here; a concrete t-norm / co-norm (possibly a reduction
        # over the `rows` axis) would be fused at this point and ride free
        # under the HBM-bound gather.

    return kernel


def _choose_tile_n(n: int, itemsize: int, rows: int,
                   vmem_budget_bytes: int = 12 * 1024 * 1024):
    """Largest column tile whose double-buffered output block fits the budget.

    Returns None when no suitable multiple-of-128 divisor of `n` exists (the
    wrapper then falls back to an XLA gather)."""
    max_tn = max(128, vmem_budget_bytes // (2 * rows * itemsize))
    if n <= max_tn:
        return n                      # single full-width block; no tiling needed
    t = (max_tn // 128) * 128
    while t >= 128:
        if n % t == 0:
            return t
        t -= 128
    return None


def formula_forward(truth_values_pm: jnp.ndarray,
                    pred_indices: jnp.ndarray,
                    *,
                    tile_n: int | None = None,
                    use_pallas: bool | None = None) -> jnp.ndarray:
    """Pallas equivalent of Formula.forward on a predicate-major truth table.

    truth_values_pm : dtype[P, N] (row p = predicate p, samples on lanes).
    pred_indices    : i32[K]      predicate read by each atomic sub-formula.
    returns         : dtype[K, N] gathered rows (== PyTorch concat output,
                      transposed; Formula.function is identity/abstract).
    """
    P, N = truth_values_pm.shape
    K = int(pred_indices.shape[0])
    dtype = truth_values_pm.dtype
    itemsize = jnp.dtype(dtype).itemsize
    rows = max(8, 32 // max(itemsize, 1))      # 8 for f32, 16 for bf16

    idx = jnp.clip(jnp.asarray(pred_indices, jnp.int32), 0, P - 1)

    tn = tile_n if tile_n is not None else _choose_tile_n(N, itemsize, rows)
    tiny = K * N * itemsize < (128 * 1024)
    if use_pallas is None:
        use_pallas = (tn is not None) and (N % tn == 0) and not tiny
    if (not use_pallas) or tn is None or (N % tn != 0):
        # Small / awkward shapes: a plain XLA gather wins (and is always valid).
        return truth_values_pm[idx, :]

    k_pad = ((K + rows - 1) // rows) * rows
    if k_pad != K:
        idx = jnp.pad(idx, (0, k_pad - K))     # padded rows read predicate 0

    n_tiles = N // tn
    k_groups = k_pad // rows

    out = pl.pallas_call(
        _make_gather_kernel(rows, tn),
        out_shape=jax.ShapeDtypeStruct((k_pad, N), dtype),
        grid_spec=pltpu.PrefetchScalarGridSpec(
            num_scalar_prefetch=1,
            grid=(n_tiles, k_groups),          # N-tiles lead -> megacore on v7x
            in_specs=[pl.BlockSpec(memory_space=pl.ANY)],   # raw HBM table
            out_specs=pl.BlockSpec((rows, tn), lambda j, kg, idx_ref: (kg, j)),
            scratch_shapes=[pltpu.SemaphoreType.DMA((rows,))],
        ),
        compiler_params=pltpu.CompilerParams(
            dimension_semantics=("parallel", "parallel"),
        ),
        cost_estimate=pl.CostEstimate(
            flops=0,
            transcendentals=0,
            bytes_accessed=2 * k_pad * N * itemsize + k_pad * 4,
        ),
    )(idx, truth_values_pm)

    return out[:K] if k_pad != K else out


def formula_forward_sample_major(truth_values_nm: jnp.ndarray,
                                 pred_indices: jnp.ndarray,
                                 **kw) -> jnp.ndarray:
    """Matches the PyTorch [N, P] -> [N, K] (concat along dim 1) convention.

    Transposes are XLA glue outside the kernel; prefer the predicate-major
    `formula_forward` end-to-end when possible."""
    return formula_forward(truth_values_nm.T, pred_indices, **kw).T


if __name__ == "__main__":
    key = jax.random.PRNGKey(0)

    # Small shapes consistent with the module: P predicates x N groundings,
    # K atomic sub-formulas.
    P, N, K = 16, 256, 4
    truth_values_pm = jax.random.uniform(key, (P, N), dtype=jnp.float32)
    pred_indices = jnp.array([3, 0, 11, 9], dtype=jnp.int32)

    # Pallas path: single full-width block, and an explicitly tiled-N variant.
    out = jax.block_until_ready(
        formula_forward(truth_values_pm, pred_indices, use_pallas=True))
    out_tiled = jax.block_until_ready(
        formula_forward(truth_values_pm, pred_indices, tile_n=128,
                        use_pallas=True))
    # Auto mode (problem is tiny -> XLA gather fallback); must agree.
    out_auto = jax.block_until_ready(
        formula_forward(truth_values_pm, pred_indices))

    # Reference 1: predicate-major row gather.
    ref_kn = truth_values_pm[pred_indices, :]                    # [K, N]
    # Reference 2: mirror the PyTorch path (per-sub-formula column on the
    # sample-major view, concat along dim 1; abstract function == identity).
    tv_nm = truth_values_pm.T                                    # [N, P]
    cols = [tv_nm[:, int(i)][:, None] for i in list(pred_indices)]
    ref_nk = jnp.concatenate(cols, axis=1) if len(cols) > 1 else cols[0]

    assert out.shape == (K, N), out.shape
    assert jnp.array_equal(out, ref_kn), "mismatch vs predicate-major reference"
    assert jnp.array_equal(out_tiled, ref_kn), "mismatch with tile_n=128"
    assert jnp.array_equal(out_auto, ref_kn), "mismatch in auto-fallback mode"
    assert jnp.array_equal(out.T, ref_nk), "mismatch vs PyTorch-style concat"

    out_nk = jax.block_until_ready(
        formula_forward_sample_major(tv_nm, pred_indices, use_pallas=True))
    assert jnp.array_equal(out_nk, ref_nk), "sample-major wrapper mismatch"

    print("KERNEL_OK")
</pallas_src>

<mosaic_0001>
module attributes {stable_mosaic.version = 11 : i64} {
  func.func @kernel(%arg0: i32, %arg1: i32, %arg2: memref<8xi32, #tpu.memory_space<smem>>, %arg3: memref<16x256xf32, #tpu.memory_space<any>>, %arg4: memref<8x256xf32, #tpu.memory_space<vmem>>, %arg5: memref<8x!tpu.dma_semaphore, #tpu.memory_space<semaphore_mem>>) attributes {dimension_semantics = [#tpu.dimension_semantics<parallel>, #tpu.dimension_semantics<parallel>], iteration_bounds = array<i64: 1, 1>, scalar_prefetch = 1 : i64, scratch_operands = 1 : i64, tpu.core_type = #tpu.core_type<tc>, window_params = [{}, {transform_indices = @transform_1, window_bounds = array<i64: 8, 256>}]} {
    %c256_i32 = arith.constant 256 : i32
    %0 = arith.muli %arg0, %c256_i32 : i32
    %1 = tpu.assume_multiple %0, 128 : i32
    %c8_i32 = arith.constant 8 : i32
    %2 = arith.muli %arg1, %c8_i32 : i32
    %c0_i32 = arith.constant 0 : i32
    %3 = arith.addi %2, %c0_i32 : i32
    %4 = arith.index_cast %3 : i32 to index
    %5 = memref.load %arg2[%4] : memref<8xi32, #tpu.memory_space<smem>>
    %c0_i32_0 = arith.constant 0 : i32
    %6 = tpu.memref_slice %arg3[%5, %1] : memref<16x256xf32, #tpu.memory_space<any>> -> memref<1x256xf32, #tpu.memory_space<any>>
    %c0_i32_1 = arith.constant 0 : i32
    %c0_i32_2 = arith.constant 0 : i32
    %7 = tpu.memref_slice %arg4[%c0_i32_1, %c0_i32_2] : memref<8x256xf32, #tpu.memory_space<vmem>> -> memref<1x256xf32, #tpu.memory_space<vmem>>
    %8 = tpu.memref_slice %arg5[%c0_i32_0] : memref<8x!tpu.dma_semaphore, #tpu.memory_space<semaphore_mem>> -> memref<1x!tpu.dma_semaphore, #tpu.memory_space<semaphore_mem>>
    %9 = tpu.memref_squeeze %8 : memref<1x!tpu.dma_semaphore, #tpu.memory_space<semaphore_mem>> -> memref<!tpu.dma_semaphore, #tpu.memory_space<semaphore_mem>>
    tpu.enqueue_dma source(%6 : memref<1x256xf32, #tpu.memory_space<any>>) target(%7 : memref<1x256xf32, #tpu.memory_space<vmem>>) target_semaphore(%9 : memref<!tpu.dma_semaphore, #tpu.memory_space<semaphore_mem>>)
    %c8_i32_3 = arith.constant 8 : i32
    %10 = arith.muli %arg1, %c8_i32_3 : i32
    %c1_i32 = arith.constant 1 : i32
    %11 = arith.addi %10, %c1_i32 : i32
    %12 = arith.index_cast %11 : i32 to index
    %13 = memref.load %arg2[%12] : memref<8xi32, #tpu.memory_space<smem>>
    %c1_i32_4 = arith.constant 1 : i32
    %14 = tpu.memref_slice %arg3[%13, %1] : memref<16x256xf32, #tpu.memory_space<any>> -> memref<1x256xf32, #tpu.memory_space<any>>
    %c1_i32_5 = arith.constant 1 : i32
    %c0_i32_6 = arith.constant 0 : i32
    %15 = tpu.memref_slice %arg4[%c1_i32_5, %c0_i32_6] : memref<8x256xf32, #tpu.memory_space<vmem>> -> memref<1x256xf32, #tpu.memory_space<vmem>>
    %16 = tpu.memref_slice %arg5[%c1_i32_4] : memref<8x!tpu.dma_semaphore, #tpu.memory_space<semaphore_mem>> -> memref<1x!tpu.dma_semaphore, #tpu.memory_space<semaphore_mem>>
    %17 = tpu.memref_squeeze %16 : memref<1x!tpu.dma_semaphore, #tpu.memory_space<semaphore_mem>> -> memref<!tpu.dma_semaphore, #tpu.memory_space<semaphore_mem>>
    tpu.enqueue_dma source(%14 : memref<1x256xf32, #tpu.memory_space<any>>) target(%15 : memref<1x256xf32, #tpu.memory_space<vmem>>) target_semaphore(%17 : memref<!tpu.dma_semaphore, #tpu.memory_space<semaphore_mem>>)
    %c8_i32_7 = arith.constant 8 : i32
    %18 = arith.muli %arg1, %c8_i32_7 : i32
    %c2_i32 = arith.constant 2 : i32
    %19 = arith.addi %18, %c2_i32 : i32
    %20 = arith.index_cast %19 : i32 to index
    %21 = memref.load %arg2[%20] : memref<8xi32, #tpu.memory_space<smem>>
    %c2_i32_8 = arith.constant 2 : i32
    %22 = tpu.memref_slice %arg3[%21, %1] : memref<16x256xf32, #tpu.memory_space<any>> -> memref<1x256xf32, #tpu.memory_space<any>>
    %c2_i32_9 = arith.constant 2 : i32
    %c0_i32_10 = arith.constant 0 : i32
    %23 = tpu.memref_slice %arg4[%c2_i32_9, %c0_i32_10] : memref<8x256xf32, #tpu.memory_space<vmem>> -> memref<1x256xf32, #tpu.memory_space<vmem>>
    %24 = tpu.memref_slice %arg5[%c2_i32_8] : memref<8x!tpu.dma_semaphore, #tpu.memory_space<semaphore_mem>> -> memref<1x!tpu.dma_semaphore, #tpu.memory_space<semaphore_mem>>
    %25 = tpu.memref_squeeze %24 : memref<1x!tpu.dma_semaphore, #tpu.memory_space<semaphore_mem>> -> memref<!tpu.dma_semaphore, #tpu.memory_space<semaphore_mem>>
    tpu.enqueue_dma source(%22 : memref<1x256xf32, #tpu.memory_space<any>>) target(%23 : memref<1x256xf32, #tpu.memory_space<vmem>>) target_semaphore(%25 : memref<!tpu.dma_semaphore, #tpu.memory_space<semaphore_mem>>)
    %c8_i32_11 = arith.constant 8 : i32
    %26 = arith.muli %arg1, %c8_i32_11 : i32
    %c3_i32 = arith.constant 3 : i32
    %27 = arith.addi %26, %c3_i32 : i32
    %28 = arith.index_cast %27 : i32 to index
    %29 = memref.load %arg2[%28] : memref<8xi32, #tpu.memory_space<smem>>
    %c3_i32_12 = arith.constant 3 : i32
    %30 = tpu.memref_slice %arg3[%29, %1] : memref<16x256xf32, #tpu.memory_space<any>> -> memref<1x256xf32, #tpu.memory_space<any>>
    %c3_i32_13 = arith.constant 3 : i32
    %c0_i32_14 = arith.constant 0 : i32
    %31 = tpu.memref_slice %arg4[%c3_i32_13, %c0_i32_14] : memref<8x256xf32, #tpu.memory_space<vmem>> -> memref<1x256xf32, #tpu.memory_space<vmem>>
    %32 = tpu.memref_slice %arg5[%c3_i32_12] : memref<8x!tpu.dma_semaphore, #tpu.memory_space<semaphore_mem>> -> memref<1x!tpu.dma_semaphore, #tpu.memory_space<semaphore_mem>>
    %33 = tpu.memref_squeeze %32 : memref<1x!tpu.dma_semaphore, #tpu.memory_space<semaphore_mem>> -> memref<!tpu.dma_semaphore, #tpu.memory_space<semaphore_mem>>
    tpu.enqueue_dma source(%30 : memref<1x256xf32, #tpu.memory_space<any>>) target(%31 : memref<1x256xf32, #tpu.memory_space<vmem>>) target_semaphore(%33 : memref<!tpu.dma_semaphore, #tpu.memory_space<semaphore_mem>>)
    %c8_i32_15 = arith.constant 8 : i32
    %34 = arith.muli %arg1, %c8_i32_15 : i32
    %c4_i32 = arith.constant 4 : i32
    %35 = arith.addi %34, %c4_i32 : i32
    %36 = arith.index_cast %35 : i32 to index
    %37 = memref.load %arg2[%36] : memref<8xi32, #tpu.memory_space<smem>>
    %c4_i32_16 = arith.constant 4 : i32
    %38 = tpu.memref_slice %arg3[%37, %1] : memref<16x256xf32, #tpu.memory_space<any>> -> memref<1x256xf32, #tpu.memory_space<any>>
    %c4_i32_17 = arith.constant 4 : i32
    %c0_i32_18 = arith.constant 0 : i32
    %39 = tpu.memref_slice %arg4[%c4_i32_17, %c0_i32_18] : memref<8x256xf32, #tpu.memory_space<vmem>> -> memref<1x256xf32, #tpu.memory_space<vmem>>
    %40 = tpu.memref_slice %arg5[%c4_i32_16] : memref<8x!tpu.dma_semaphore, #tpu.memory_space<semaphore_mem>> -> memref<1x!tpu.dma_semaphore, #tpu.memory_space<semaphore_mem>>
    %41 = tpu.memref_squeeze %40 : memref<1x!tpu.dma_semaphore, #tpu.memory_space<semaphore_mem>> -> memref<!tpu.dma_semaphore, #tpu.memory_space<semaphore_mem>>
    tpu.enqueue_dma source(%38 : memref<1x256xf32, #tpu.memory_space<any>>) target(%39 : memref<1x256xf32, #tpu.memory_space<vmem>>) target_semaphore(%41 : memref<!tpu.dma_semaphore, #tpu.memory_space<semaphore_mem>>)
    %c8_i32_19 = arith.constant 8 : i32
    %42 = arith.muli %arg1, %c8_i32_19 : i32
    %c5_i32 = arith.constant 5 : i32
    %43 = arith.addi %42, %c5_i32 : i32
    %44 = arith.index_cast %43 : i32 to index
    %45 = memref.load %arg2[%44] : memref<8xi32, #tpu.memory_space<smem>>
    %c5_i32_20 = arith.constant 5 : i32
    %46 = tpu.memref_slice %arg3[%45, %1] : memref<16x256xf32, #tpu.memory_space<any>> -> memref<1x256xf32, #tpu.memory_space<any>>
    %c5_i32_21 = arith.constant 5 : i32
    %c0_i32_22 = arith.constant 0 : i32
    %47 = tpu.memref_slice %arg4[%c5_i32_21, %c0_i32_22] : memref<8x256xf32, #tpu.memory_space<vmem>> -> memref<1x256xf32, #tpu.memory_space<vmem>>
    %48 = tpu.memref_slice %arg5[%c5_i32_20] : memref<8x!tpu.dma_semaphore, #tpu.memory_space<semaphore_mem>> -> memref<1x!tpu.dma_semaphore, #tpu.memory_space<semaphore_mem>>
    %49 = tpu.memref_squeeze %48 : memref<1x!tpu.dma_semaphore, #tpu.memory_space<semaphore_mem>> -> memref<!tpu.dma_semaphore, #tpu.memory_space<semaphore_mem>>
    tpu.enqueue_dma source(%46 : memref<1x256xf32, #tpu.memory_space<any>>) target(%47 : memref<1x256xf32, #tpu.memory_space<vmem>>) target_semaphore(%49 : memref<!tpu.dma_semaphore, #tpu.memory_space<semaphore_mem>>)
    %c8_i32_23 = arith.constant 8 : i32
    %50 = arith.muli %arg1, %c8_i32_23 : i32
    %c6_i32 = arith.constant 6 : i32
    %51 = arith.addi %50, %c6_i32 : i32
    %52 = arith.index_cast %51 : i32 to index
    %53 = memref.load %arg2[%52] : memref<8xi32, #tpu.memory_space<smem>>
    %c6_i32_24 = arith.constant 6 : i32
    %54 = tpu.memref_slice %arg3[%53, %1] : memref<16x256xf32, #tpu.memory_space<any>> -> memref<1x256xf32, #tpu.memory_space<any>>
    %c6_i32_25 = arith.constant 6 : i32
    %c0_i32_26 = arith.constant 0 : i32
    %55 = tpu.memref_slice %arg4[%c6_i32_25, %c0_i32_26] : memref<8x256xf32, #tpu.memory_space<vmem>> -> memref<1x256xf32, #tpu.memory_space<vmem>>
    %56 = tpu.memref_slice %arg5[%c6_i32_24] : memref<8x!tpu.dma_semaphore, #tpu.memory_space<semaphore_mem>> -> memref<1x!tpu.dma_semaphore, #tpu.memory_space<semaphore_mem>>
    %57 = tpu.memref_squeeze %56 : memref<1x!tpu.dma_semaphore, #tpu.memory_space<semaphore_mem>> -> memref<!tpu.dma_semaphore, #tpu.memory_space<semaphore_mem>>
    tpu.enqueue_dma source(%54 : memref<1x256xf32, #tpu.memory_space<any>>) target(%55 : memref<1x256xf32, #tpu.memory_space<vmem>>) target_semaphore(%57 : memref<!tpu.dma_semaphore, #tpu.memory_space<semaphore_mem>>)
    %c8_i32_27 = arith.constant 8 : i32
    %58 = arith.muli %arg1, %c8_i32_27 : i32
    %c7_i32 = arith.constant 7 : i32
    %59 = arith.addi %58, %c7_i32 : i32
    %60 = arith.index_cast %59 : i32 to index
    %61 = memref.load %arg2[%60] : memref<8xi32, #tpu.memory_space<smem>>
    %c7_i32_28 = arith.constant 7 : i32
    %62 = tpu.memref_slice %arg3[%61, %1] : memref<16x256xf32, #tpu.memory_space<any>> -> memref<1x256xf32, #tpu.memory_space<any>>
    %c7_i32_29 = arith.constant 7 : i32
    %c0_i32_30 = arith.constant 0 : i32
    %63 = tpu.memref_slice %arg4[%c7_i32_29, %c0_i32_30] : memref<8x256xf32, #tpu.memory_space<vmem>> -> memref<1x256xf32, #tpu.memory_space<vmem>>
    %64 = tpu.memref_slice %arg5[%c7_i32_28] : memref<8x!tpu.dma_semaphore, #tpu.memory_space<semaphore_mem>> -> memref<1x!tpu.dma_semaphore, #tpu.memory_space<semaphore_mem>>
    %65 = tpu.memref_squeeze %64 : memref<1x!tpu.dma_semaphore, #tpu.memory_space<semaphore_mem>> -> memref<!tpu.dma_semaphore, #tpu.memory_space<semaphore_mem>>
    tpu.enqueue_dma source(%62 : memref<1x256xf32, #tpu.memory_space<any>>) target(%63 : memref<1x256xf32, #tpu.memory_space<vmem>>) target_semaphore(%65 : memref<!tpu.dma_semaphore, #tpu.memory_space<semaphore_mem>>)
    %c0_i32_31 = arith.constant 0 : i32
    %66 = tpu.memref_slice %arg3[%5, %1] : memref<16x256xf32, #tpu.memory_space<any>> -> memref<1x256xf32, #tpu.memory_space<any>>
    %c0_i32_32 = arith.constant 0 : i32
    %c0_i32_33 = arith.constant 0 : i32
    %67 = tpu.memref_slice %arg4[%c0_i32_32, %c0_i32_33] : memref<8x256xf32, #tpu.memory_space<vmem>> -> memref<1x256xf32, #tpu.memory_space<vmem>>
    %68 = tpu.memref_slice %arg5[%c0_i32_31] : memref<8x!tpu.dma_semaphore, #tpu.memory_space<semaphore_mem>> -> memref<1x!tpu.dma_semaphore, #tpu.memory_space<semaphore_mem>>
    %69 = tpu.memref_squeeze %68 : memref<1x!tpu.dma_semaphore, #tpu.memory_space<semaphore_mem>> -> memref<!tpu.dma_semaphore, #tpu.memory_space<semaphore_mem>>
    tpu.wait_dma2 semaphore(%69 : memref<!tpu.dma_semaphore, #tpu.memory_space<semaphore_mem>>) src(%66 : memref<1x256xf32, #tpu.memory_space<any>>) dst(%67 : memref<1x256xf32, #tpu.memory_space<vmem>>)
    %c1_i32_34 = arith.constant 1 : i32
    %70 = tpu.memref_slice %arg3[%13, %1] : memref<16x256xf32, #tpu.memory_space<any>> -> memref<1x256xf32, #tpu.memory_space<any>>
    %c1_i32_35 = arith.constant 1 : i32
    %c0_i32_36 = arith.constant 0 : i32
    %71 = tpu.memref_slice %arg4[%c1_i32_35, %c0_i32_36] : memref<8x256xf32, #tpu.memory_space<vmem>> -> memref<1x256xf32, #tpu.memory_space<vmem>>
    %72 = tpu.memref_slice %arg5[%c1_i32_34] : memref<8x!tpu.dma_semaphore, #tpu.memory_space<semaphore_mem>> -> memref<1x!tpu.dma_semaphore, #tpu.memory_space<semaphore_mem>>
    %73 = tpu.memref_squeeze %72 : memref<1x!tpu.dma_semaphore, #tpu.memory_space<semaphore_mem>> -> memref<!tpu.dma_semaphore, #tpu.memory_space<semaphore_mem>>
    tpu.wait_dma2 semaphore(%73 : memref<!tpu.dma_semaphore, #tpu.memory_space<semaphore_mem>>) src(%70 : memref<1x256xf32, #tpu.memory_space<any>>) dst(%71 : memref<1x256xf32, #tpu.memory_space<vmem>>)
    %c2_i32_37 = arith.constant 2 : i32
    %74 = tpu.memref_slice %arg3[%21, %1] : memref<16x256xf32, #tpu.memory_space<any>> -> memref<1x256xf32, #tpu.memory_space<any>>
    %c2_i32_38 = arith.constant 2 : i32
    %c0_i32_39 = arith.constant 0 : i32
    %75 = tpu.memref_slice %arg4[%c2_i32_38, %c0_i32_39] : memref<8x256xf32, #tpu.memory_space<vmem>> -> memref<1x256xf32, #tpu.memory_space<vmem>>
    %76 = tpu.memref_slice %arg5[%c2_i32_37] : memref<8x!tpu.dma_semaphore, #tpu.memory_space<semaphore_mem>> -> memref<1x!tpu.dma_semaphore, #tpu.memory_space<semaphore_mem>>
    %77 = tpu.memref_squeeze %76 : memref<1x!tpu.dma_semaphore, #tpu.memory_space<semaphore_mem>> -> memref<!tpu.dma_semaphore, #tpu.memory_space<semaphore_mem>>
    tpu.wait_dma2 semaphore(%77 : memref<!tpu.dma_semaphore, #tpu.memory_space<semaphore_mem>>) src(%74 : memref<1x256xf32, #tpu.memory_space<any>>) dst(%75 : memref<1x256xf32, #tpu.memory_space<vmem>>)
    %c3_i32_40 = arith.constant 3 : i32
    %78 = tpu.memref_slice %arg3[%29, %1] : memref<16x256xf32, #tpu.memory_space<any>> -> memref<1x256xf32, #tpu.memory_space<any>>
    %c3_i32_41 = arith.constant 3 : i32
    %c0_i32_42 = arith.constant 0 : i32
    %79 = tpu.memref_slice %arg4[%c3_i32_41, %c0_i32_42] : memref<8x256xf32, #tpu.memory_space<vmem>> -> memref<1x256xf32, #tpu.memory_space<vmem>>
    %80 = tpu.memref_slice %arg5[%c3_i32_40] : memref<8x!tpu.dma_semaphore, #tpu.memory_space<semaphore_mem>> -> memref<1x!tpu.dma_semaphore, #tpu.memory_space<semaphore_mem>>
    %81 = tpu.memref_squeeze %80 : memref<1x!tpu.dma_semaphore, #tpu.memory_space<semaphore_mem>> -> memref<!tpu.dma_semaphore, #tpu.memory_space<semaphore_mem>>
    tpu.wait_dma2 semaphore(%81 : memref<!tpu.dma_semaphore, #tpu.memory_space<semaphore_mem>>) src(%78 : memref<1x256xf32, #tpu.memory_space<any>>) dst(%79 : memref<1x256xf32, #tpu.memory_space<vmem>>)
    %c4_i32_43 = arith.constant 4 : i32
    %82 = tpu.memref_slice %arg3[%37, %1] : memref<16x256xf32, #tpu.memory_space<any>> -> memref<1x256xf32, #tpu.memory_space<any>>
    %c4_i32_44 = arith.constant 4 : i32
    %c0_i32_45 = arith.constant 0 : i32
    %83 = tpu.memref_slice %arg4[%c4_i32_44, %c0_i32_45] : memref<8x256xf32, #tpu.memory_space<vmem>> -> memref<1x256xf32, #tpu.memory_space<vmem>>
    %84 = tpu.memref_slice %arg5[%c4_i32_43] : memref<8x!tpu.dma_semaphore, #tpu.memory_space<semaphore_mem>> -> memref<1x!tpu.dma_semaphore, #tpu.memory_space<semaphore_mem>>
    %85 = tpu.memref_squeeze %84 : memref<1x!tpu.dma_semaphore, #tpu.memory_space<semaphore_mem>> -> memref<!tpu.dma_semaphore, #tpu.memory_space<semaphore_mem>>
    tpu.wait_dma2 semaphore(%85 : memref<!tpu.dma_semaphore, #tpu.memory_space<semaphore_mem>>) src(%82 : memref<1x256xf32, #tpu.memory_space<any>>) dst(%83 : memref<1x256xf32, #tpu.memory_space<vmem>>)
    %c5_i32_46 = arith.constant 5 : i32
    %86 = tpu.memref_slice %arg3[%45, %1] : memref<16x256xf32, #tpu.memory_space<any>> -> memref<1x256xf32, #tpu.memory_space<any>>
    %c5_i32_47 = arith.constant 5 : i32
    %c0_i32_48 = arith.constant 0 : i32
    %87 = tpu.memref_slice %arg4[%c5_i32_47, %c0_i32_48] : memref<8x256xf32, #tpu.memory_space<vmem>> -> memref<1x256xf32, #tpu.memory_space<vmem>>
    %88 = tpu.memref_slice %arg5[%c5_i32_46] : memref<8x!tpu.dma_semaphore, #tpu.memory_space<semaphore_mem>> -> memref<1x!tpu.dma_semaphore, #tpu.memory_space<semaphore_mem>>
    %89 = tpu.memref_squeeze %88 : memref<1x!tpu.dma_semaphore, #tpu.memory_space<semaphore_mem>> -> memref<!tpu.dma_semaphore, #tpu.memory_space<semaphore_mem>>
    tpu.wait_dma2 semaphore(%89 : memref<!tpu.dma_semaphore, #tpu.memory_space<semaphore_mem>>) src(%86 : memref<1x256xf32, #tpu.memory_space<any>>) dst(%87 : memref<1x256xf32, #tpu.memory_space<vmem>>)
    %c6_i32_49 = arith.constant 6 : i32
    %90 = tpu.memref_slice %arg3[%53, %1] : memref<16x256xf32, #tpu.memory_space<any>> -> memref<1x256xf32, #tpu.memory_space<any>>
    %c6_i32_50 = arith.constant 6 : i32
    %c0_i32_51 = arith.constant 0 : i32
    %91 = tpu.memref_slice %arg4[%c6_i32_50, %c0_i32_51] : memref<8x256xf32, #tpu.memory_space<vmem>> -> memref<1x256xf32, #tpu.memory_space<vmem>>
    %92 = tpu.memref_slice %arg5[%c6_i32_49] : memref<8x!tpu.dma_semaphore, #tpu.memory_space<semaphore_mem>> -> memref<1x!tpu.dma_semaphore, #tpu.memory_space<semaphore_mem>>
    %93 = tpu.memref_squeeze %92 : memref<1x!tpu.dma_semaphore, #tpu.memory_space<semaphore_mem>> -> memref<!tpu.dma_semaphore, #tpu.memory_space<semaphore_mem>>
    tpu.wait_dma2 semaphore(%93 : memref<!tpu.dma_semaphore, #tpu.memory_space<semaphore_mem>>) src(%90 : memref<1x256xf32, #tpu.memory_space<any>>) dst(%91 : memref<1x256xf32, #tpu.memory_space<vmem>>)
    %c7_i32_52 = arith.constant 7 : i32
    %94 = tpu.memref_slice %arg3[%61, %1] : memref<16x256xf32, #tpu.memory_space<any>> -> memref<1x256xf32, #tpu.memory_space<any>>
    %c7_i32_53 = arith.constant 7 : i32
    %c0_i32_54 = arith.constant 0 : i32
    %95 = tpu.memref_slice %arg4[%c7_i32_53, %c0_i32_54] : memref<8x256xf32, #tpu.memory_space<vmem>> -> memref<1x256xf32, #tpu.memory_space<vmem>>
    %96 = tpu.memref_slice %arg5[%c7_i32_52] : memref<8x!tpu.dma_semaphore, #tpu.memory_space<semaphore_mem>> -> memref<1x!tpu.dma_semaphore, #tpu.memory_space<semaphore_mem>>
    %97 = tpu.memref_squeeze %96 : memref<1x!tpu.dma_semaphore, #tpu.memory_space<semaphore_mem>> -> memref<!tpu.dma_semaphore, #tpu.memory_space<semaphore_mem>>
    tpu.wait_dma2 semaphore(%97 : memref<!tpu.dma_semaphore, #tpu.memory_space<semaphore_mem>>) src(%94 : memref<1x256xf32, #tpu.memory_space<any>>) dst(%95 : memref<1x256xf32, #tpu.memory_space<vmem>>)
    return
  }
  func.func @transform_1(%arg0: i32, %arg1: i32, %arg2: memref<8xi32, #tpu.memory_space<smem>>) -> (i32, i32) {
    %c0_i32 = arith.constant 0 : i32
    return %arg1, %arg0 : i32, i32
  }
}

</mosaic_0001>

<llo_original>
// kernel: tpu_custom_call.1
$region0: #{tpu_custom_call.1}
  #allocation0 [shape = 'u32[]', space=smem, size = 0x4, offset = 0x4, fixed_abs, tag = 'smem constant byte address 0x4 - core index']
  #allocation1 [shape = 'u32[144,128]{1,0:T(1,128)}', space=vmem, size = 0x12000, scoped, tag = 'internal scratch']
  #allocation2 [shape = 's32[8]{0}', space=sflag, size = 0x20, scoped, tag = 'scratch operand']
  #allocation3 [shape = 's32[1]{0}', space=sflag, size = 0x4, scoped, tag = 'scoped memory for tpu_custom_call.1']
  #allocation4 [shape = 'u8[512]{0}', space=smem, size = 0x200, scoped, tag = 'prefetched SMEM operand 0']
  #allocation7 [shape = 's32[]', space=sflag, size = 0x4, offset = 0, fixed_abs, tag = 'sflag constant byte address 0x0 - dummy sync flag']
  #allocation8 [shape = 's32[]', space=sflag, size = 0x4, offset = 0, fixed_abs, tag = 'sflag constant byte address 0x0 - dummy sync flag']
  #allocation9 [shape = 's32[]', space=sflag, size = 0x4, offset = 0, fixed_abs, tag = 'sflag constant byte address 0x0 - dummy sync flag']
  #allocation10 [shape = 's32[]', space=sflag, size = 0x4, offset = 0, fixed_abs, tag = 'sflag constant byte address 0x0 - dummy sync flag']
  #allocation11 [shape = 's32[]', space=sflag, size = 0x4, offset = 0, fixed_abs, tag = 'sflag constant byte address 0x0 - dummy sync flag']
  #allocation12 [shape = 's32[]', space=sflag, size = 0x4, offset = 0, fixed_abs, tag = 'sflag constant byte address 0x0 - dummy sync flag']
  #allocation13 [shape = 's32[]', space=sflag, size = 0x4, offset = 0, fixed_abs, tag = 'sflag constant byte address 0x0 - dummy sync flag']
  #allocation14 [shape = 's32[]', space=sflag, size = 0x4, offset = 0, fixed_abs, tag = 'sflag constant byte address 0x0 - dummy sync flag']
  %s0 = inlined_call_operand.hbm [shape: s32[8], index: 0, kind: input, shape index: {}]
  %s1 = inlined_call_operand.hbm [shape: f32[16,256], index: 1, kind: input, shape index: {}]
  %s2 = inlined_call_operand.hbm [shape: f32[8,256], index: 2, kind: output, shape index: {}]
  %s3 = sld [smem:[#allocation0]]
  $region10: #{tpu_custom_call.1} parent=0
    _
  %s5 = ssub.s32 1, %s3
  %s6 = scalar_select 0, %s5, %s3
  %8 = dma.hbm_to_smem %s0, 16, [#allocation4], [#allocation3]
  %9 = dma.done [#allocation3], 16
  %10 = sfence
  $region1: #{tpu_custom_call.1} parent=0
    #allocation5 [shape = 'u8[8192]{0}', space=vmem, size = 0x2000, scoped, tag = 'output window, operand 0, single buffered']
    #allocation6 [shape = 's32[1]{0}', space=sflag, size = 0x4, scoped, tag = 'scoped memory for tpu_custom_call.1']
    %11 = vsyncpa [#allocation6], 0
    %s12 = smul.u32 0, 256
    %s13 = smul.u32 0, 8
    %s14 = sld [smem:[#allocation4 + %s13]]
    %s15 = sshrl.u32 %s14, 3
    %s16 = sand.u32 %s14, 7
    %s17 = smul.u32 %s15, 16
    %s18 = sadd.s32 %s16, %s17
    %s19 = sshra.s32 %s12, 7
    %s20 = sand.u32 %s12, 127
    %s21 = smul.u32 %s19, 8
    %s22 = sadd.s32 %s21, %s18
    %s23 = smul.addr %s22, 16
    %s24 = scalar_lea.hbm %s1, %s23
    %s26 = sshll.u32 [#allocation5], 4
    %s27 = int_to_ptr.vmem [resolvable:$true] %s26
    %29 = dma.hbm_to_vmem [thread:$0]  %s24, 32, %s27, [#allocation2], 128, 128, 1
    %s30 = sadd.s32 %s13, 1
    %s31 = sld [smem:[#allocation4 + %s30]]
    %s32 = sshrl.u32 %s31, 3
    %s33 = sand.u32 %s31, 7
    %s34 = smul.u32 %s32, 16
    %s35 = sadd.s32 %s33, %s34
    %s36 = sadd.s32 %s21, %s35
    %s37 = smul.addr %s36, 16
    %s38 = scalar_lea.hbm %s1, %s37
    %s39 = scalar_lea.vmem [#allocation5], 1
    %s40 = scalar_lea.sflag [#allocation2], 1
    %s42 = sshll.u32 %s39, 4
    %s43 = int_to_ptr.vmem [resolvable:$true] %s42
    %45 = dma.hbm_to_vmem [thread:$0]  %s38, 32, %s43, %s40, 128, 128, 1
    %s46 = sadd.s32 %s13, 2
    %s47 = sld [smem:[#allocation4 + %s46]]
    %s48 = sshrl.u32 %s47, 3
    %s49 = sand.u32 %s47, 7
    %s50 = smul.u32 %s48, 16
    %s51 = sadd.s32 %s49, %s50
    %s52 = sadd.s32 %s21, %s51
    %s53 = smul.addr %s52, 16
    %s54 = scalar_lea.hbm %s1, %s53
    %s55 = scalar_lea.vmem [#allocation5], 2
    %s56 = scalar_lea.sflag [#allocation2], 2
    %s58 = sshll.u32 %s55, 4
    %s59 = int_to_ptr.vmem [resolvable:$true] %s58
    %61 = dma.hbm_to_vmem [thread:$0]  %s54, 32, %s59, %s56, 128, 128, 1
    %s62 = sadd.s32 %s13, 3
    %s63 = sld [smem:[#allocation4 + %s62]]
    %s64 = sshrl.u32 %s63, 3
    %s65 = sand.u32 %s63, 7
    %s66 = smul.u32 %s64, 16
    %s67 = sadd.s32 %s65, %s66
    %s68 = sadd.s32 %s21, %s67
    %s69 = smul.addr %s68, 16
    %s70 = scalar_lea.hbm %s1, %s69
    %s71 = scalar_lea.vmem [#allocation5], 3
    %s72 = scalar_lea.sflag [#allocation2], 3
    %s74 = sshll.u32 %s71, 4
    %s75 = int_to_ptr.vmem [resolvable:$true] %s74
    %77 = dma.hbm_to_vmem [thread:$0]  %s70, 32, %s75, %s72, 128, 128, 1
    %s78 = sadd.s32 %s13, 4
    %s79 = sld [smem:[#allocation4 + %s78]]
    %s80 = sshrl.u32 %s79, 3
    %s81 = sand.u32 %s79, 7
    %s82 = smul.u32 %s80, 16
    %s83 = sadd.s32 %s81, %s82
    %s84 = sadd.s32 %s21, %s83
    %s85 = smul.addr %s84, 16
    %s86 = scalar_lea.hbm %s1, %s85
    %s87 = scalar_lea.vmem [#allocation5], 4
    %s88 = scalar_lea.sflag [#allocation2], 4
    %s90 = sshll.u32 %s87, 4
    %s91 = int_to_ptr.vmem [resolvable:$true] %s90
    %93 = dma.hbm_to_vmem [thread:$0]  %s86, 32, %s91, %s88, 128, 128, 1
    %s94 = sadd.s32 %s13, 5
    %s95 = sld [smem:[#allocation4 + %s94]]
    %s96 = sshrl.u32 %s95, 3
    %s97 = sand.u32 %s95, 7
    %s98 = smul.u32 %s96, 16
    %s99 = sadd.s32 %s97, %s98
    %s100 = sadd.s32 %s21, %s99
    %s101 = smul.addr %s100, 16
    %s102 = scalar_lea.hbm %s1, %s101
    %s103 = scalar_lea.vmem [#allocation5], 5
    %s104 = scalar_lea.sflag [#allocation2], 5
    %s106 = sshll.u32 %s103, 4
    %s107 = int_to_ptr.vmem [resolvable:$true] %s106
    %109 = dma.hbm_to_vmem [thread:$0]  %s102, 32, %s107, %s104, 128, 128, 1
    %s110 = sadd.s32 %s13, 6
    %s111 = sld [smem:[#allocation4 + %s110]]
    %s112 = sshrl.u32 %s111, 3
    %s113 = sand.u32 %s111, 7
    %s114 = smul.u32 %s112, 16
    %s115 = sadd.s32 %s113, %s114
    %s116 = sadd.s32 %s21, %s115
    %s117 = smul.addr %s116, 16
    %s118 = scalar_lea.hbm %s1, %s117
    %s119 = scalar_lea.vmem [#allocation5], 6
    %s120 = scalar_lea.sflag [#allocation2], 6
    %s122 = sshll.u32 %s119, 4
    %s123 = int_to_ptr.vmem [resolvable:$true] %s122
    %125 = dma.hbm_to_vmem [thread:$0]  %s118, 32, %s123, %s120, 128, 128, 1
    %s126 = sadd.s32 %s13, 7
    %s127 = sld [smem:[#allocation4 + %s126]]
    %s128 = sshrl.u32 %s127, 3
    %s129 = sand.u32 %s127, 7
    %s130 = smul.u32 %s128, 16
    %s131 = sadd.s32 %s129, %s130
    %s132 = sadd.s32 %s21, %s131
    %s133 = smul.addr %s132, 16
    %s134 = scalar_lea.hbm %s1, %s133
    %s135 = scalar_lea.vmem [#allocation5], 7
    %s136 = scalar_lea.sflag [#allocation2], 7
    %s138 = sshll.u32 %s135, 4
    %s139 = int_to_ptr.vmem [resolvable:$true] %s138
    %141 = dma.hbm_to_vmem [thread:$0]  %s134, 32, %s139, %s136, 128, 128, 1
    %s142 = smul.u32 1, 2
    %s143 = sshll.u32 %s142, 4
    %144 = dma.done [#allocation2], %s143
    %s145 = sshll.u32 %s142, 4
    %146 = dma.done %s40, %s145
    %s147 = sshll.u32 %s142, 4
    %148 = dma.done %s56, %s147
    %s149 = sshll.u32 %s142, 4
    %150 = dma.done %s72, %s149
    %s151 = sshll.u32 %s142, 4
    %152 = dma.done %s88, %s151
    %s153 = sshll.u32 %s142, 4
    %154 = dma.done %s104, %s153
    %s155 = sshll.u32 %s142, 4
    %156 = dma.done %s120, %s155
    %s157 = sshll.u32 %s142, 4
    %158 = dma.done %s136, %s157
    // Predicated region
    $region2: #{tpu_custom_call.1} parent=1 // pred_check
      _
    $region3: #{tpu_custom_call.1} parent=1 // pred_check_branch
      %160 = sbr.rel (0) target = $region5
    $region4: #{tpu_custom_call.1} parent=1 // pred_region
      %s162 = ssub.s32 256, 256
      %163 = vsyncadd [#allocation6], %s162
      %s165 = sshll.u32 [#allocation5], 4
      %s166 = int_to_ptr.vmem [resolvable:$true] %s165
      %168 = dma.vmem_to_hbm [thread:$0]  %s166, 256, %s2, [#allocation6]
    $region5: #{tpu_custom_call.1} parent=1 // pred_fallthru
      _
    // Predicated region
    $region6: #{tpu_custom_call.1} parent=1 // pred_check
      _
    $region7: #{tpu_custom_call.1} parent=1 // pred_check_branch
      %170 = sbr.rel (0) target = $region9
    $region8: #{tpu_custom_call.1} parent=1 // pred_region
      %171 = dma.done [#allocation6], 256
    $region9: #{tpu_custom_call.1} parent=1 // pred_fallthru
      _
    %172 = vsyncpa [#allocation6], 1
  %173 = vsyncmov [#allocation2]
  %s174 = vpop.sfrf %173
  %p175 = scmp.eq.s32.totalorder %s174, 0
  %p176 = pneg %p175
  %178 = shalt.err (%p176)
  %s179 = scalar_lea.sflag [#allocation2], 1
  %180 = vsyncmov %s179
  %s181 = vpop.sfrf %180
  %p182 = scmp.eq.s32.totalorder %s181, 0
  %p183 = pneg %p182
  %185 = shalt.err (%p183)
  %s186 = scalar_lea.sflag [#allocation2], 2
  %187 = vsyncmov %s186
  %s188 = vpop.sfrf %187
  %p189 = scmp.eq.s32.totalorder %s188, 0
  %p190 = pneg %p189
  %192 = shalt.err (%p190)
  %s193 = scalar_lea.sflag [#allocation2], 3
  %194 = vsyncmov %s193
  %s195 = vpop.sfrf %194
  %p196 = scmp.eq.s32.totalorder %s195, 0
  %p197 = pneg %p196
  %199 = shalt.err (%p197)
  %s200 = scalar_lea.sflag [#allocation2], 4
  %201 = vsyncmov %s200
  %s202 = vpop.sfrf %201
  %p203 = scmp.eq.s32.totalorder %s202, 0
  %p204 = pneg %p203
  %206 = shalt.err (%p204)
  %s207 = scalar_lea.sflag [#allocation2], 5
  %208 = vsyncmov %s207
  %s209 = vpop.sfrf %208
  %p210 = scmp.eq.s32.totalorder %s209, 0
  %p211 = pneg %p210
  %213 = shalt.err (%p211)
  %s214 = scalar_lea.sflag [#allocation2], 6
  %215 = vsyncmov %s214
  %s216 = vpop.sfrf %215
  %p217 = scmp.eq.s32.totalorder %s216, 0
  %p218 = pneg %p217
  %220 = shalt.err (%p218)
  %s221 = scalar_lea.sflag [#allocation2], 7
  %222 = vsyncmov %s221
  %s223 = vpop.sfrf %222
  %p224 = scmp.eq.s32.totalorder %s223, 0
  %p225 = pneg %p224
  %227 = shalt.err (%p225)

</llo_original>
